<compile_context>
chip_gen: v5e
topology: v5e:2x2
jax: 0.10.0
libtpu: 0.0.40
codegen_flags: <defaults>
</compile_context>

<pallas_src>
import functools
import math

import jax
import jax.numpy as jnp
from jax import lax
from jax.experimental import pallas as pl
from jax.experimental.pallas import tpu as pltpu

_BF16 = jnp.bfloat16
_F32 = jnp.float32


def _round_up(x, m):
    return ((x + m - 1) // m) * m


def _vmem_limit_bytes():
    """Per-generation scoped-VMEM budget (≈64 MiB on v5e/v6e, ≈48 MiB on v7x)."""
    cap = 128 * 1024 * 1024
    try:
        info = pltpu.get_tpu_info()
        cap = int(getattr(info, "vmem_capacity_bytes", cap))
    except Exception:
        pass
    return min(64 * 1024 * 1024, max(16 * 1024 * 1024, (cap * 3) // 4))


# ----------------------------------------------------------------------------
# Kernel 1: fused Q/K/V projection in the lane-dense (N*S, E) view.
# Weights are block-diagonal kron(I_H, W^T) of shape (E, E), resident across steps,
# so the outputs are already head-packed and lane-dense (no per-head slicing here).
# ----------------------------------------------------------------------------
def _qkv_proj_kernel(q_ref, k_ref, v_ref, wq_ref, wk_ref, wv_ref,
                     qo_ref, ko_ref, vo_ref):
    q = q_ref[...].astype(_BF16)
    k = k_ref[...].astype(_BF16)
    v = v_ref[...].astype(_BF16)
    qo_ref[...] = jnp.dot(q, wq_ref[...], preferred_element_type=_F32).astype(_BF16)
    ko_ref[...] = jnp.dot(k, wk_ref[...], preferred_element_type=_F32).astype(_BF16)
    vo_ref[...] = jnp.dot(v, wv_ref[...], preferred_element_type=_F32).astype(_BF16)


# ----------------------------------------------------------------------------
# Kernel 2: banded sliding-window attention + fused fc_out for one (batch, q-tile).
#   q_ref : (1, tq, E) bf16 projected queries for this tile (E = H*D, lane-dense)
#   k_ref : (1, S,  E) bf16 projected keys   (resident across query tiles)
#   v_ref : (1, S,  E) bf16 projected values (resident across query tiles)
#   wo_ref: (E, E)     bf16 fc_out weight (transposed), resident
#   b_ref : (1, E)     f32  fc_out bias, resident
#   o_ref : (1, tq, E) f32  FINAL output (context @ woT + bo) -> no HBM round trip
# Only the key window covering [q0-W, q0+tq-1+W] is sliced; out-of-range window slots
# keep score 0 and contribute exp(0) to the denominator (reference quirk).
# ----------------------------------------------------------------------------
def _swa_fused_kernel(q_ref, k_ref, v_ref, wo_ref, b_ref, o_ref,
                      *, S, H, D, W, tq, kwin):
    qb = pl.program_id(1)
    q0 = qb * tq

    if kwin == S:
        # Window spans the whole sequence (short-S case): static slices only.
        start = 0
        k_win = k_ref[0]                                  # (S, E)
        v_win = v_ref[0]
    else:
        # 16-aligned dynamic window start (bf16 sublane packing); kwin carries
        # enough slack that alignment never loses coverage of the band.
        start = jnp.clip(((q0 - W) // 16) * 16, 0, S - kwin)
        start = pl.multiple_of(start, 16)
        k_win = k_ref[0, pl.ds(start, kwin), :]           # (kwin, E)
        v_win = v_ref[0, pl.ds(start, kwin), :]

    q_all = q_ref[0]                                      # (tq, E) bf16

    # Band mask in absolute positions (shared across heads).
    q_pos = q0 + lax.broadcasted_iota(jnp.int32, (tq, kwin), 0)
    k_pos = start + lax.broadcasted_iota(jnp.int32, (tq, kwin), 1)
    band = jnp.abs(q_pos - k_pos) <= W                    # (tq, kwin)

    # Analytic valid-slot count per query row (no cross-lane reduction needed).
    rows = q0 + lax.broadcasted_iota(jnp.int32, (tq, 1), 0)
    n_valid = (jnp.minimum(rows + W, S - 1) - jnp.maximum(rows - W, 0) + 1).astype(_F32)
    n_invalid = jnp.float32(2 * W + 1) - n_valid          # zero-filled OOB slots
    has_invalid = n_invalid > 0.0
    neg = jnp.float32(-1e30)

    outs = []
    for h in range(H):                                    # static unroll over heads
        lo = h * D
        qh = q_all[:, lo:lo + D]                          # (tq, D)   bf16
        kh = k_win[:, lo:lo + D]                          # (kwin, D) bf16
        vh = v_win[:, lo:lo + D]                          # (kwin, D) bf16

        s = lax.dot_general(qh, kh, (((1,), (1,)), ((), ())),
                            preferred_element_type=_F32)  # (tq, kwin)
        s_band = jnp.where(band, s, neg)
        m_band = jnp.max(s_band, axis=-1, keepdims=True)
        # Out-of-range window slots hold score 0 and take part in the softmax.
        m = jnp.where(has_invalid, jnp.maximum(m_band, 0.0), m_band)
        e = jnp.where(band, jnp.exp(s_band - m), 0.0)
        denom = jnp.sum(e, axis=-1, keepdims=True) + n_invalid * jnp.exp(-m)

        ctx = jnp.dot(e.astype(_BF16), vh, preferred_element_type=_F32)  # (tq, D)
        outs.append(ctx * pl.reciprocal(denom, approx=True))

    # Fused fc_out on the (tq, E) context tile, then one lane-dense store.
    ctx_all = jnp.concatenate(outs, axis=-1).astype(_BF16)               # (tq, E)
    o_ref[0] = jnp.dot(ctx_all, wo_ref[...], preferred_element_type=_F32) + b_ref[...]


def sliding_window_attention(value, key_, query, params, *, window_size):
    N, S, H, D = query.shape
    E = H * D
    NS = N * S
    W = window_size
    wq, wk, wv, wo, bo = (params[k] for k in ("wq", "wk", "wv", "wo", "bo"))
    vmem_limit = _vmem_limit_bytes()

    # Tiny one-time host-side weight prep: block-diagonal lane-dense projection
    # weights (E, E) and transposed fc_out weight, all bf16.
    eyeH = jnp.eye(H, dtype=wq.dtype)
    wqE = jnp.kron(eyeH, wq.T).astype(_BF16)
    wkE = jnp.kron(eyeH, wk.T).astype(_BF16)
    wvE = jnp.kron(eyeH, wv.T).astype(_BF16)
    woT = wo.T.astype(_BF16)
    boE = bo.reshape(1, E).astype(_F32)

    # ----------------- fused Q/K/V projection (lane-dense, E-wide matmuls) ----------
    q2 = query.reshape(NS, E)   # free views: no HBM transpose anywhere in the pipeline
    k2 = key_.reshape(NS, E)
    v2 = value.reshape(NS, E)

    tm_p = NS if NS <= 1024 else 1024
    row_spec = pl.BlockSpec((tm_p, E), lambda i: (i, 0))
    w_spec = pl.BlockSpec((E, E), lambda i: (0, 0))
    qp2, kp2, vp2 = pl.pallas_call(
        _qkv_proj_kernel,
        out_shape=[jax.ShapeDtypeStruct((NS, E), _BF16)] * 3,
        grid_spec=pltpu.PrefetchScalarGridSpec(
            num_scalar_prefetch=0,
            grid=(pl.cdiv(NS, tm_p),),
            in_specs=[row_spec, row_spec, row_spec, w_spec, w_spec, w_spec],
            out_specs=[row_spec, row_spec, row_spec]),
        compiler_params=pltpu.CompilerParams(
            dimension_semantics=("parallel",),
            vmem_limit_bytes=vmem_limit),
    )(q2, k2, v2, wqE, wkE, wvE)

    # Free reshape into the lane-dense (N, S, H*D) layout (heads packed in lane axis).
    qpE = qp2.reshape(N, S, E)
    kpE = kp2.reshape(N, S, E)
    vpE = vp2.reshape(N, S, E)

    # ----------------- banded sliding-window attention + fused fc_out ----------------
    if S <= 256:
        tq = S
    elif S % 256 == 0:
        tq = 256                                  # fills the 256-wide MXU on v6e/v7x
    elif S % 128 == 0:
        tq = 128
    else:
        tq = S
    assert S % tq == 0, "query tile must divide seq_len"

    # Key-window rows covering the band: 128-multiple, +16 slack for 16-aligned start.
    kwin = _round_up(tq + 2 * W + 16, 128)
    if kwin >= S:
        kwin = S

    out = pl.pallas_call(
        functools.partial(_swa_fused_kernel, S=S, H=H, D=D, W=W, tq=tq, kwin=kwin),
        out_shape=jax.ShapeDtypeStruct((N, S, E), _F32),
        grid_spec=pltpu.PrefetchScalarGridSpec(
            num_scalar_prefetch=0,
            grid=(N, S // tq),
            in_specs=[pl.BlockSpec((1, tq, E), lambda n, qb: (n, qb, 0)),
                      # K/V index maps ignore qb -> blocks stay resident across
                      # query tiles of the same batch (no re-DMA per tile).
                      pl.BlockSpec((1, S, E), lambda n, qb: (n, 0, 0)),
                      pl.BlockSpec((1, S, E), lambda n, qb: (n, 0, 0)),
                      # fc_out weight/bias are resident constants.
                      pl.BlockSpec((E, E), lambda n, qb: (0, 0)),
                      pl.BlockSpec((1, E), lambda n, qb: (0, 0))],
            out_specs=pl.BlockSpec((1, tq, E), lambda n, qb: (n, qb, 0))),
        compiler_params=pltpu.CompilerParams(
            # Both axes parallel: output tiles are disjoint (no accumulator across qb),
            # lets v7x split query tiles across its two TensorCores.
            dimension_semantics=("parallel", "parallel"),
            vmem_limit_bytes=vmem_limit),
    )(qpE, kpE, vpE, woT, boE)

    return out


# ----------------------------------------------------------------------------
# Plain-JAX reference (intended semantics, explicit window loops).
# matmul_dtype=bfloat16 mirrors the kernel's precision policy (bf16 MXU inputs,
# f32 accumulation, bf16-stored intermediates) for a tight numerical check.
# ----------------------------------------------------------------------------
def reference(value, key_, query, params, *, window_size, matmul_dtype=jnp.float32):
    N, S, H, D = query.shape
    W = window_size
    wq, wk, wv, wo, bo = (params[k] for k in ("wq", "wk", "wv", "wo", "bo"))
    cast = lambda a: a.astype(matmul_dtype)

    def proj(x, w):
        y = jnp.einsum("nshd,od->nsho", cast(x), cast(w),
                       preferred_element_type=jnp.float32)
        return y.astype(matmul_dtype).astype(jnp.float32)

    qp, kp, vp = proj(query, wq), proj(key_, wk), proj(value, wv)

    scores = jnp.zeros((N, H, S, 2 * W + 1), jnp.float32)
    for i in range(S):
        for j in range(2 * W + 1):
            p = i + j - W
            if 0 <= p < S:
                scores = scores.at[:, :, i, j].set(
                    jnp.einsum("nhd,nhd->nh", qp[:, i], kp[:, p]))
    attnw = jax.nn.softmax(scores, axis=-1)

    out = jnp.zeros((N, S, H, D), jnp.float32)
    for i in range(S):
        for j in range(2 * W + 1):
            p = i + j - W
            if 0 <= p < S:
                out = out.at[:, i].add(attnw[:, :, i, j][..., None] * vp[:, p])
    out = out.reshape(N, S, H * D)
    return jnp.dot(cast(out), cast(wo).T, preferred_element_type=jnp.float32) + bo


if __name__ == "__main__":
    # Small, module-consistent shapes.
    embed_size, heads, window_size = 32, 2, 2
    head_dim = embed_size // heads
    N, S = 2, 8

    root = jax.random.PRNGKey(0)
    ks = jax.random.split(root, 8)
    scale = 1.0 / math.sqrt(head_dim)
    params = {
        "wq": scale * jax.random.normal(ks[0], (head_dim, head_dim), jnp.float32),
        "wk": scale * jax.random.normal(ks[1], (head_dim, head_dim), jnp.float32),
        "wv": scale * jax.random.normal(ks[2], (head_dim, head_dim), jnp.float32),
        "wo": (1.0 / math.sqrt(embed_size))
              * jax.random.normal(ks[3], (embed_size, embed_size), jnp.float32),
        "bo": 0.1 * jax.random.normal(ks[4], (embed_size,), jnp.float32),
    }

    value = jax.random.normal(ks[5], (N, S, heads, head_dim), jnp.float32)
    key_in = jax.random.normal(ks[6], (N, S, heads, head_dim), jnp.float32)
    query = jax.random.normal(ks[7], (N, S, heads, head_dim), jnp.float32)

    out = sliding_window_attention(value, key_in, query, params,
                                   window_size=window_size)
    out = jax.block_until_ready(out)

    assert out.shape == (N, S, embed_size), out.shape
    assert bool(jnp.all(jnp.isfinite(out)))

    # Tight check against a reference mirroring the kernel's bf16-matmul policy.
    ref_bf16 = reference(value, key_in, query, params,
                         window_size=window_size, matmul_dtype=jnp.bfloat16)
    assert bool(jnp.allclose(out, ref_bf16, rtol=2e-2, atol=2e-2)), (
        float(jnp.max(jnp.abs(out - ref_bf16))))

    # Looser sanity check against the full-f32 reference (bf16-matmul tolerance).
    ref_f32 = reference(value, key_in, query, params,
                        window_size=window_size, matmul_dtype=jnp.float32)
    assert bool(jnp.allclose(out, ref_f32, rtol=5e-2, atol=5e-2)), (
        float(jnp.max(jnp.abs(out - ref_f32))))

    print("KERNEL_OK")
</pallas_src>

<mosaic_0001>
module attributes {stable_mosaic.version = 11 : i64} {
  func.func @_qkv_proj_kernel(%arg0: i32, %arg1: memref<16x32xf32, #tpu.memory_space<vmem>>, %arg2: memref<16x32xf32, #tpu.memory_space<vmem>>, %arg3: memref<16x32xf32, #tpu.memory_space<vmem>>, %arg4: memref<32x32xbf16, #tpu.memory_space<vmem>>, %arg5: memref<32x32xbf16, #tpu.memory_space<vmem>>, %arg6: memref<32x32xbf16, #tpu.memory_space<vmem>>, %arg7: memref<16x32xbf16, #tpu.memory_space<vmem>>, %arg8: memref<16x32xbf16, #tpu.memory_space<vmem>>, %arg9: memref<16x32xbf16, #tpu.memory_space<vmem>>) attributes {dimension_semantics = [#tpu.dimension_semantics<parallel>], iteration_bounds = array<i64: 1>, scalar_prefetch = 0 : i64, scratch_operands = 0 : i64, tpu.core_type = #tpu.core_type<tc>, window_params = [{transform_indices = @transform_0, window_bounds = array<i64: 16, 32>}, {transform_indices = @transform_1, window_bounds = array<i64: 16, 32>}, {transform_indices = @transform_2, window_bounds = array<i64: 16, 32>}, {pipeline_mode = #tpu.pipeline_mode<synchronous>, transform_indices = @transform_3, window_bounds = array<i64: 32, 32>}, {pipeline_mode = #tpu.pipeline_mode<synchronous>, transform_indices = @transform_4, window_bounds = array<i64: 32, 32>}, {pipeline_mode = #tpu.pipeline_mode<synchronous>, transform_indices = @transform_5, window_bounds = array<i64: 32, 32>}, {transform_indices = @transform_6, window_bounds = array<i64: 16, 32>}, {transform_indices = @transform_7, window_bounds = array<i64: 16, 32>}, {transform_indices = @transform_8, window_bounds = array<i64: 16, 32>}]} {
    %c0 = arith.constant 0 : index
    %c0_0 = arith.constant 0 : index
    %0 = vector.load %arg1[%c0, %c0_0] : memref<16x32xf32, #tpu.memory_space<vmem>>, vector<16x32xf32>
    %1 = arith.truncf %0 : vector<16x32xf32> to vector<16x32xbf16>
    %c0_1 = arith.constant 0 : index
    %c0_2 = arith.constant 0 : index
    %2 = vector.load %arg2[%c0_1, %c0_2] : memref<16x32xf32, #tpu.memory_space<vmem>>, vector<16x32xf32>
    %3 = arith.truncf %2 : vector<16x32xf32> to vector<16x32xbf16>
    %c0_3 = arith.constant 0 : index
    %c0_4 = arith.constant 0 : index
    %4 = vector.load %arg3[%c0_3, %c0_4] : memref<16x32xf32, #tpu.memory_space<vmem>>, vector<16x32xf32>
    %5 = arith.truncf %4 : vector<16x32xf32> to vector<16x32xbf16>
    %c0_5 = arith.constant 0 : index
    %c0_6 = arith.constant 0 : index
    %6 = vector.load %arg4[%c0_5, %c0_6] : memref<32x32xbf16, #tpu.memory_space<vmem>>, vector<32x32xbf16>
    %cst = arith.constant dense<0.000000e+00> : vector<16x32xf32>
    %7 = tpu.matmul %1, %6, %cst {dimension_numbers = #tpu.dot_dimension_numbers<[1], [0], [0], [1], [0, 0, 1, 1], [], []>} : vector<16x32xbf16>, vector<32x32xbf16>, vector<16x32xf32> -> vector<16x32xf32>
    %8 = arith.truncf %7 : vector<16x32xf32> to vector<16x32xbf16>
    %c0_7 = arith.constant 0 : index
    %c0_8 = arith.constant 0 : index
    %9 = vector.load %arg7[%c0_7, %c0_8] : memref<16x32xbf16, #tpu.memory_space<vmem>>, vector<16x32xbf16>
    tpu.vector_store %arg7[%c0_7, %c0_8], %8 {strides = array<i32>} : memref<16x32xbf16, #tpu.memory_space<vmem>>, vector<16x32xbf16>,
    %c0_9 = arith.constant 0 : index
    %c0_10 = arith.constant 0 : index
    %10 = vector.load %arg5[%c0_9, %c0_10] : memref<32x32xbf16, #tpu.memory_space<vmem>>, vector<32x32xbf16>
    %cst_11 = arith.constant dense<0.000000e+00> : vector<16x32xf32>
    %11 = tpu.matmul %3, %10, %cst_11 {dimension_numbers = #tpu.dot_dimension_numbers<[1], [0], [0], [1], [0, 0, 1, 1], [], []>} : vector<16x32xbf16>, vector<32x32xbf16>, vector<16x32xf32> -> vector<16x32xf32>
    %12 = arith.truncf %11 : vector<16x32xf32> to vector<16x32xbf16>
    %c0_12 = arith.constant 0 : index
    %c0_13 = arith.constant 0 : index
    %13 = vector.load %arg8[%c0_12, %c0_13] : memref<16x32xbf16, #tpu.memory_space<vmem>>, vector<16x32xbf16>
    tpu.vector_store %arg8[%c0_12, %c0_13], %12 {strides = array<i32>} : memref<16x32xbf16, #tpu.memory_space<vmem>>, vector<16x32xbf16>,
    %c0_14 = arith.constant 0 : index
    %c0_15 = arith.constant 0 : index
    %14 = vector.load %arg6[%c0_14, %c0_15] : memref<32x32xbf16, #tpu.memory_space<vmem>>, vector<32x32xbf16>
    %cst_16 = arith.constant dense<0.000000e+00> : vector<16x32xf32>
    %15 = tpu.matmul %5, %14, %cst_16 {dimension_numbers = #tpu.dot_dimension_numbers<[1], [0], [0], [1], [0, 0, 1, 1], [], []>} : vector<16x32xbf16>, vector<32x32xbf16>, vector<16x32xf32> -> vector<16x32xf32>
    %16 = arith.truncf %15 : vector<16x32xf32> to vector<16x32xbf16>
    %c0_17 = arith.constant 0 : index
    %c0_18 = arith.constant 0 : index
    %17 = vector.load %arg9[%c0_17, %c0_18] : memref<16x32xbf16, #tpu.memory_space<vmem>>, vector<16x32xbf16>
    tpu.vector_store %arg9[%c0_17, %c0_18], %16 {strides = array<i32>} : memref<16x32xbf16, #tpu.memory_space<vmem>>, vector<16x32xbf16>,
    return
  }
  func.func @transform_0(%arg0: i32) -> (i32, i32) {
    %c0_i32 = arith.constant 0 : i32
    %c0_i32_0 = arith.constant 0 : i32
    return %arg0, %c0_i32 : i32, i32
  }
  func.func @transform_1(%arg0: i32) -> (i32, i32) {
    %c0_i32 = arith.constant 0 : i32
    %c0_i32_0 = arith.constant 0 : i32
    return %arg0, %c0_i32 : i32, i32
  }
  func.func @transform_2(%arg0: i32) -> (i32, i32) {
    %c0_i32 = arith.constant 0 : i32
    %c0_i32_0 = arith.constant 0 : i32
    return %arg0, %c0_i32 : i32, i32
  }
  func.func @transform_3(%arg0: i32) -> (i32, i32) {
    %c0_i32 = arith.constant 0 : i32
    %c0_i32_0 = arith.constant 0 : i32
    %c0_i32_1 = arith.constant 0 : i32
    return %c0_i32, %c0_i32_0 : i32, i32
  }
  func.func @transform_4(%arg0: i32) -> (i32, i32) {
    %c0_i32 = arith.constant 0 : i32
    %c0_i32_0 = arith.constant 0 : i32
    %c0_i32_1 = arith.constant 0 : i32
    return %c0_i32, %c0_i32_0 : i32, i32
  }
  func.func @transform_5(%arg0: i32) -> (i32, i32) {
    %c0_i32 = arith.constant 0 : i32
    %c0_i32_0 = arith.constant 0 : i32
    %c0_i32_1 = arith.constant 0 : i32
    return %c0_i32, %c0_i32_0 : i32, i32
  }
  func.func @transform_6(%arg0: i32) -> (i32, i32) {
    %c0_i32 = arith.constant 0 : i32
    %c0_i32_0 = arith.constant 0 : i32
    return %arg0, %c0_i32 : i32, i32
  }
  func.func @transform_7(%arg0: i32) -> (i32, i32) {
    %c0_i32 = arith.constant 0 : i32
    %c0_i32_0 = arith.constant 0 : i32
    return %arg0, %c0_i32 : i32, i32
  }
  func.func @transform_8(%arg0: i32) -> (i32, i32) {
    %c0_i32 = arith.constant 0 : i32
    %c0_i32_0 = arith.constant 0 : i32
    return %arg0, %c0_i32 : i32, i32
  }
}

</mosaic_0001>

<llo_original>
// kernel: tpu_custom_call.1
$region0: #{tpu_custom_call.1}
  #allocation0 [shape = 'u32[]', space=smem, size = 0x4, offset = 0x4, fixed_abs, tag = 'smem constant byte address 0x4 - core index']
  #allocation1 [shape = 'u32[72,128]{1,0:T(1,128)}', space=vmem, size = 0x9000, scoped, tag = 'internal scratch']
  %s0 = inlined_call_operand.hbm [shape: f32[16,32], index: 0, kind: input, shape index: {}]
  %s1 = inlined_call_operand.hbm [shape: f32[16,32], index: 1, kind: input, shape index: {}]
  %s2 = inlined_call_operand.hbm [shape: f32[16,32], index: 2, kind: input, shape index: {}]
  %s3 = inlined_call_operand.hbm [shape: bf16[32,32], index: 3, kind: input, shape index: {}]
  %s4 = inlined_call_operand.hbm [shape: bf16[32,32], index: 4, kind: input, shape index: {}]
  %s5 = inlined_call_operand.hbm [shape: bf16[32,32], index: 5, kind: input, shape index: {}]
  %s6 = inlined_call_operand.hbm [shape: bf16[16,32], index: 6, kind: output, shape index: {0}]
  %s7 = inlined_call_operand.hbm [shape: bf16[16,32], index: 7, kind: output, shape index: {1}]
  %s8 = inlined_call_operand.hbm [shape: bf16[16,32], index: 8, kind: output, shape index: {2}]
  %9 = xla_tuple %s6, %s7, %s8
  %s10 = sld [smem:[#allocation0]]
  $region74: #{tpu_custom_call.1} parent=0
    _
  %s12 = ssub.s32 1, %s10
  %s13 = scalar_select 0, %s12, %s10
  $region1: #{tpu_custom_call.1} parent=0
    #allocation2 [shape = 'u8[8192]{0}', space=vmem, size = 0x2000, scoped, tag = 'input window, operand 0, single buffered']
    #allocation3 [shape = 's32[1]{0}', space=sflag, size = 0x4, scoped, tag = 'scoped memory for tpu_custom_call.1']
    #allocation4 [shape = 's32[1]{0}', space=sflag, size = 0x4, scoped, tag = 'scoped memory for tpu_custom_call.1']
    #allocation5 [shape = 'u8[8192]{0}', space=vmem, size = 0x2000, scoped, tag = 'input window, operand 1, single buffered']
    #allocation6 [shape = 's32[1]{0}', space=sflag, size = 0x4, scoped, tag = 'scoped memory for tpu_custom_call.1']
    #allocation7 [shape = 'u8[8192]{0}', space=vmem, size = 0x2000, scoped, tag = 'input window, operand 2, single buffered']
    #allocation8 [shape = 'u8[8192]{0}', space=vmem, size = 0x2000, scoped, tag = 'input window, operand 3, single buffered']
    #allocation9 [shape = 's32[1]{0}', space=sflag, size = 0x4, scoped, tag = 'scoped memory for tpu_custom_call.1']
    #allocation10 [shape = 'u8[8192]{0}', space=vmem, size = 0x2000, scoped, tag = 'input window, operand 4, single buffered']
    #allocation11 [shape = 'u8[8192]{0}', space=vmem, size = 0x2000, scoped, tag = 'input window, operand 5, single buffered']
    #allocation12 [shape = 's32[1]{0}', space=sflag, size = 0x4, scoped, tag = 'scoped memory for tpu_custom_call.1']
    #allocation13 [shape = 'u8[4096]{0}', space=vmem, size = 0x1000, scoped, tag = 'output window, operand 0, single buffered']
    #allocation14 [shape = 'u8[4096]{0}', space=vmem, size = 0x1000, scoped, tag = 'output window, operand 1, single buffered']
    #allocation15 [shape = 's32[1]{0}', space=sflag, size = 0x4, scoped, tag = 'scoped memory for tpu_custom_call.1']
    #allocation16 [shape = 'u8[4096]{0}', space=vmem, size = 0x1000, scoped, tag = 'output window, operand 2, single buffered']
    %14 = vsyncpa [#allocation3], 0
    %15 = vsyncpa [#allocation6], 0
    %16 = vsyncpa [#allocation9], 0
    %17 = vsyncpa [#allocation12], 0
    %18 = vsyncpa [#allocation4], 0
    %19 = vsyncpa [#allocation15], 0
    // Predicated region
    $region2: #{tpu_custom_call.1} parent=1 // pred_check
      _
    $region3: #{tpu_custom_call.1} parent=1 // pred_check_branch
      %21 = sbr.rel (0) target = $region5
    $region4: #{tpu_custom_call.1} parent=1 // pred_region
      %23 = vsyncadd [#allocation3], 0
      %s24 = sshll.u32 %s0, 4
      %s25 = int_to_ptr.hbm [resolvable:$true] %s24
      %s26 = sshll.u32 [#allocation2], 4
      %s27 = int_to_ptr.vmem [resolvable:$true] %s26
      %32 = dma.hbm_to_vmem [thread:$0]  %s25, 256, %s27, [#allocation3], 128, 128, 8
    $region5: #{tpu_custom_call.1} parent=1 // pred_fallthru
      _
    // Predicated region
    $region6: #{tpu_custom_call.1} parent=1 // pred_check
      _
    $region7: #{tpu_custom_call.1} parent=1 // pred_check_branch
      %34 = sbr.rel (0) target = $region9
    $region8: #{tpu_custom_call.1} parent=1 // pred_region
      %36 = vsyncadd [#allocation6], 0
      %s37 = sshll.u32 %s1, 4
      %s38 = int_to_ptr.hbm [resolvable:$true] %s37
      %s39 = sshll.u32 [#allocation5], 4
      %s40 = int_to_ptr.vmem [resolvable:$true] %s39
      %45 = dma.hbm_to_vmem [thread:$0]  %s38, 256, %s40, [#allocation6], 128, 128, 8
    $region9: #{tpu_custom_call.1} parent=1 // pred_fallthru
      _
    // Predicated region
    $region10: #{tpu_custom_call.1} parent=1 // pred_check
      _
    $region11: #{tpu_custom_call.1} parent=1 // pred_check_branch
      %47 = sbr.rel (0) target = $region13
    $region12: #{tpu_custom_call.1} parent=1 // pred_region
      %49 = vsyncadd [#allocation6], 0
      %s50 = sshll.u32 %s2, 4
      %s51 = int_to_ptr.hbm [resolvable:$true] %s50
      %s52 = sshll.u32 [#allocation7], 4
      %s53 = int_to_ptr.vmem [resolvable:$true] %s52
      %58 = dma.hbm_to_vmem [thread:$0]  %s51, 256, %s53, [#allocation6], 128, 128, 8
    $region13: #{tpu_custom_call.1} parent=1 // pred_fallthru
      _
    // Predicated region
    $region14: #{tpu_custom_call.1} parent=1 // pred_check
      _
    $region15: #{tpu_custom_call.1} parent=1 // pred_check_branch
      %60 = sbr.rel (0) target = $region17
    $region16: #{tpu_custom_call.1} parent=1 // pred_region
      %62 = vsyncadd [#allocation9], 0
      %s63 = sshll.u32 %s3, 4
      %s64 = int_to_ptr.hbm [resolvable:$true] %s63
      %s65 = sshll.u32 [#allocation8], 4
      %s66 = int_to_ptr.vmem [resolvable:$true] %s65
      %71 = dma.hbm_to_vmem [thread:$0]  %s64, 256, %s66, [#allocation9], 64, 64, 4
    $region17: #{tpu_custom_call.1} parent=1 // pred_fallthru
      _
    // Predicated region
    $region18: #{tpu_custom_call.1} parent=1 // pred_check
      _
    $region19: #{tpu_custom_call.1} parent=1 // pred_check_branch
      %73 = sbr.rel (0) target = $region21
    $region20: #{tpu_custom_call.1} parent=1 // pred_region
      %75 = vsyncadd [#allocation9], 0
      %s76 = sshll.u32 %s4, 4
      %s77 = int_to_ptr.hbm [resolvable:$true] %s76
      %s78 = sshll.u32 [#allocation10], 4
      %s79 = int_to_ptr.vmem [resolvable:$true] %s78
      %84 = dma.hbm_to_vmem [thread:$0]  %s77, 256, %s79, [#allocation9], 64, 64, 4
    $region21: #{tpu_custom_call.1} parent=1 // pred_fallthru
      _
    // Predicated region
    $region22: #{tpu_custom_call.1} parent=1 // pred_check
      _
    $region23: #{tpu_custom_call.1} parent=1 // pred_check_branch
      %86 = sbr.rel (0) target = $region25
    $region24: #{tpu_custom_call.1} parent=1 // pred_region
      %88 = vsyncadd [#allocation12], 0
      %s89 = sshll.u32 %s5, 4
      %s90 = int_to_ptr.hbm [resolvable:$true] %s89
      %s91 = sshll.u32 [#allocation11], 4
      %s92 = int_to_ptr.vmem [resolvable:$true] %s91
      %97 = dma.hbm_to_vmem [thread:$0]  %s90, 256, %s92, [#allocation12], 64, 64, 4
    $region25: #{tpu_custom_call.1} parent=1 // pred_fallthru
      _
    // Predicated region
    $region26: #{tpu_custom_call.1} parent=1 // pred_check
      _
    $region27: #{tpu_custom_call.1} parent=1 // pred_check_branch
      %99 = sbr.rel (0) target = $region29
    $region28: #{tpu_custom_call.1} parent=1 // pred_region
      %101 = dma.done [#allocation3], 256
    $region29: #{tpu_custom_call.1} parent=1 // pred_fallthru
      _
    // Predicated region
    $region30: #{tpu_custom_call.1} parent=1 // pred_check
      _
    $region31: #{tpu_custom_call.1} parent=1 // pred_check_branch
      %103 = sbr.rel (0) target = $region33
    $region32: #{tpu_custom_call.1} parent=1 // pred_region
      %105 = dma.done [#allocation6], 256
    $region33: #{tpu_custom_call.1} parent=1 // pred_fallthru
      _
    // Predicated region
    $region34: #{tpu_custom_call.1} parent=1 // pred_check
      _
    $region35: #{tpu_custom_call.1} parent=1 // pred_check_branch
      %107 = sbr.rel (0) target = $region37
    $region36: #{tpu_custom_call.1} parent=1 // pred_region
      %109 = dma.done [#allocation6], 256
    $region37: #{tpu_custom_call.1} parent=1 // pred_fallthru
      _
    // Predicated region
    $region38: #{tpu_custom_call.1} parent=1 // pred_check
      _
    $region39: #{tpu_custom_call.1} parent=1 // pred_check_branch
      %111 = sbr.rel (0) target = $region41
    $region40: #{tpu_custom_call.1} parent=1 // pred_region
      %113 = dma.done [#allocation9], 256
    $region41: #{tpu_custom_call.1} parent=1 // pred_fallthru
      _
    // Predicated region
    $region42: #{tpu_custom_call.1} parent=1 // pred_check
      _
    $region43: #{tpu_custom_call.1} parent=1 // pred_check_branch
      %115 = sbr.rel (0) target = $region45
    $region44: #{tpu_custom_call.1} parent=1 // pred_region
      %117 = dma.done [#allocation9], 256
    $region45: #{tpu_custom_call.1} parent=1 // pred_fallthru
      _
    // Predicated region
    $region46: #{tpu_custom_call.1} parent=1 // pred_check
      _
    $region47: #{tpu_custom_call.1} parent=1 // pred_check_branch
      %119 = sbr.rel (0) target = $region49
    $region48: #{tpu_custom_call.1} parent=1 // pred_region
      %121 = dma.done [#allocation12], 256
    $region49: #{tpu_custom_call.1} parent=1 // pred_fallthru
      _
    %v123 = vld [vmem:[#allocation2] sm:$0xff]
    %v124 = vld [vmem:[#allocation2 + $0x8] sm:$0xff]
    %v125 = vpack.c.bf16 %v124, %v123
    %v126 = vld [vmem:[#allocation5] sm:$0xff]
    %v127 = vld [vmem:[#allocation5 + $0x8] sm:$0xff]
    %v128 = vpack.c.bf16 %v127, %v126
    %v129 = vld [vmem:[#allocation7] sm:$0xff]
    %v130 = vld [vmem:[#allocation7 + $0x8] sm:$0xff]
    %v131 = vpack.c.bf16 %v130, %v129
    %v132 = vld [vmem:[#allocation8] sm:$0xf]
    %v133 = vld [vmem:[#allocation8 + $0x4] sm:$0xf]
    %v134 = vld [vmem:[#allocation8 + $0x8] sm:$0xf]
    %v135 = vld [vmem:[#allocation8 + $0xc] sm:$0xf]
    %v140 = vunpack.c.l.b16 %v132
    %v141 = vunpack.c.l.b16 %v133
    %v142 = vunpack.c.l.b16 %v134
    %v143 = vunpack.c.l.b16 %v135
    %v144 = vpack.c.b16 %v141, %v140
    %v145 = vpack.c.b16 %v143, %v142
    %vm148 = vcmask 261120
    %v150 = vsel %vm148, %v125, 0
    %152 = vmatpush.bf16.msra.mxu0 0
    %153 = vmatpush.bf16.msra.mxu0 0
    %154 = vmatpush.bf16.msra.mxu0 0
    %155 = vmatpush.bf16.msra.mxu0 0
    %156 = vmatpush.bf16.msra.mxu0 0
    %157 = vmatpush.bf16.msra.mxu0 0
    %158 = vmatpush.bf16.msra.mxu0 %v145
    %159 = vmatpush.bf16.msra.mxu0 %v144
    %160 = vmatmul.bf16.gmra.mxu0 %v150
    %v161 = vpop.f32.mrf.mxu0
    %v162 = vadd.f32 0.0, %v161
    %v163 = vpop.f32.mrf.mxu0
    %v164 = vadd.f32 0.0, %v163
    %165 = vdwg.mxu0
    %v166 = vpack.c.bf16 %v162, %v162
    %v167 = vpack.c.bf16 %v164, %v164
    %vm168 = vcmask 257024
    %169 = vst.msk [vmem:[#allocation13] sm:$0xf] %vm168, %v166
    %170 = vst.msk [vmem:[#allocation13 + $0x4] sm:$0xf] %vm168, %v167
    %v171 = vld [vmem:[#allocation10] sm:$0xf]
    %v172 = vld [vmem:[#allocation10 + $0x4] sm:$0xf]
    %v173 = vld [vmem:[#allocation10 + $0x8] sm:$0xf]
    %v174 = vld [vmem:[#allocation10 + $0xc] sm:$0xf]
    %v179 = vunpack.c.l.b16 %v171
    %v180 = vunpack.c.l.b16 %v172
    %v181 = vunpack.c.l.b16 %v173
    %v182 = vunpack.c.l.b16 %v174
    %v183 = vpack.c.b16 %v180, %v179
    %v184 = vpack.c.b16 %v182, %v181
    %v188 = vsel %vm148, %v128, 0
    %190 = vmatpush.bf16.msra.mxu0 0
    %191 = vmatpush.bf16.msra.mxu0 0
    %192 = vmatpush.bf16.msra.mxu0 0
    %193 = vmatpush.bf16.msra.mxu0 0
    %194 = vmatpush.bf16.msra.mxu0 0
    %195 = vmatpush.bf16.msra.mxu0 0
    %196 = vmatpush.bf16.msra.mxu0 %v184
    %197 = vmatpush.bf16.msra.mxu0 %v183
    %198 = vmatmul.bf16.gmra.mxu0 %v188
    %v199 = vpop.f32.mrf.mxu0
    %v200 = vadd.f32 0.0, %v199
    %v201 = vpop.f32.mrf.mxu0
    %v202 = vadd.f32 0.0, %v201
    %203 = vdwg.mxu0
    %v204 = vpack.c.bf16 %v200, %v200
    %v205 = vpack.c.bf16 %v202, %v202
    %206 = vst.msk [vmem:[#allocation14] sm:$0xf] %vm168, %v204
    %207 = vst.msk [vmem:[#allocation14 + $0x4] sm:$0xf] %vm168, %v205
    %v208 = vld [vmem:[#allocation11] sm:$0xf]
    %v209 = vld [vmem:[#allocation11 + $0x4] sm:$0xf]
    %v210 = vld [vmem:[#allocation11 + $0x8] sm:$0xf]
    %v211 = vld [vmem:[#allocation11 + $0xc] sm:$0xf]
    %v216 = vunpack.c.l.b16 %v208
    %v217 = vunpack.c.l.b16 %v209
    %v218 = vunpack.c.l.b16 %v210
    %v219 = vunpack.c.l.b16 %v211
    %v220 = vpack.c.b16 %v217, %v216
    %v221 = vpack.c.b16 %v219, %v218
    %v225 = vsel %vm148, %v131, 0
    %227 = vmatpush.bf16.msra.mxu0 0
    %228 = vmatpush.bf16.msra.mxu0 0
    %229 = vmatpush.bf16.msra.mxu0 0
    %230 = vmatpush.bf16.msra.mxu0 0
    %231 = vmatpush.bf16.msra.mxu0 0
    %232 = vmatpush.bf16.msra.mxu0 0
    %233 = vmatpush.bf16.msra.mxu0 %v221
    %234 = vmatpush.bf16.msra.mxu0 %v220
    %235 = vmatmul.bf16.gmra.mxu0 %v225
    %v236 = vpop.f32.mrf.mxu0
    %v237 = vadd.f32 0.0, %v236
    %v238 = vpop.f32.mrf.mxu0
    %v239 = vadd.f32 0.0, %v238
    %240 = vdwg.mxu0
    %v241 = vpack.c.bf16 %v237, %v237
    %v242 = vpack.c.bf16 %v239, %v239
    %243 = vst.msk [vmem:[#allocation16] sm:$0xf] %vm168, %v241
    %244 = vst.msk [vmem:[#allocation16 + $0x4] sm:$0xf] %vm168, %v242
    // Predicated region
    $region50: #{tpu_custom_call.1} parent=1 // pred_check
      _
    $region51: #{tpu_custom_call.1} parent=1 // pred_check_branch
      %246 = sbr.rel (0) target = $region53
    $region52: #{tpu_custom_call.1} parent=1 // pred_region
      %248 = vsyncadd [#allocation4], 0
      %s249 = sshll.u32 [#allocation13], 4
      %s250 = int_to_ptr.vmem [resolvable:$true] %s249
      %s251 = sshll.u32 %s6, 4
      %s252 = int_to_ptr.hbm [resolvable:$true] %s251
      %257 = dma.vmem_to_hbm [thread:$0]  %s250, 128, %s252, [#allocation4], 64, 64, 4
    $region53: #{tpu_custom_call.1} parent=1 // pred_fallthru
      _
    // Predicated region
    $region54: #{tpu_custom_call.1} parent=1 // pred_check
      _
    $region55: #{tpu_custom_call.1} parent=1 // pred_check_branch
      %259 = sbr.rel (0) target = $region57
    $region56: #{tpu_custom_call.1} parent=1 // pred_region
      %261 = vsyncadd [#allocation15], 0
      %s262 = sshll.u32 [#allocation14], 4
      %s263 = int_to_ptr.vmem [resolvable:$true] %s262
      %s264 = sshll.u32 %s7, 4
      %s265 = int_to_ptr.hbm [resolvable:$true] %s264
      %270 = dma.vmem_to_hbm [thread:$0]  %s263, 128, %s265, [#allocation15], 64, 64, 4
    $region57: #{tpu_custom_call.1} parent=1 // pred_fallthru
      _
    // Predicated region
    $region58: #{tpu_custom_call.1} parent=1 // pred_check
      _
    $region59: #{tpu_custom_call.1} parent=1 // pred_check_branch
      %272 = sbr.rel (0) target = $region61
    $region60: #{tpu_custom_call.1} parent=1 // pred_region
      %274 = vsyncadd [#allocation15], 0
      %s275 = sshll.u32 [#allocation16], 4
      %s276 = int_to_ptr.vmem [resolvable:$true] %s275
      %s277 = sshll.u32 %s8, 4
      %s278 = int_to_ptr.hbm [resolvable:$true] %s277
      %283 = dma.vmem_to_hbm [thread:$0]  %s276, 128, %s278, [#allocation15], 64, 64, 4
    $region61: #{tpu_custom_call.1} parent=1 // pred_fallthru
      _
    // Predicated region
    $region62: #{tpu_custom_call.1} parent=1 // pred_check
      _
    $region63: #{tpu_custom_call.1} parent=1 // pred_check_branch
      %285 = sbr.rel (0) target = $region65
    $region64: #{tpu_custom_call.1} parent=1 // pred_region
      %287 = dma.done [#allocation4], 128
    $region65: #{tpu_custom_call.1} parent=1 // pred_fallthru
      _
    // Predicated region
    $region66: #{tpu_custom_call.1} parent=1 // pred_check
      _
    $region67: #{tpu_custom_call.1} parent=1 // pred_check_branch
      %289 = sbr.rel (0) target = $region69
    $region68: #{tpu_custom_call.1} parent=1 // pred_region
      %291 = dma.done [#allocation15], 128
    $region69: #{tpu_custom_call.1} parent=1 // pred_fallthru
      _
    // Predicated region
    $region70: #{tpu_custom_call.1} parent=1 // pred_check
      _
    $region71: #{tpu_custom_call.1} parent=1 // pred_check_branch
      %293 = sbr.rel (0) target = $region73
    $region72: #{tpu_custom_call.1} parent=1 // pred_region
      %295 = dma.done [#allocation15], 128
    $region73: #{tpu_custom_call.1} parent=1 // pred_fallthru
      _
    %296 = vsyncpa [#allocation3], 1
    %297 = vsyncpa [#allocation6], 1
    %298 = vsyncpa [#allocation9], 1
    %299 = vsyncpa [#allocation12], 1
    %300 = vsyncpa [#allocation4], 1
    %301 = vsyncpa [#allocation15], 1

</llo_original>
